<compile_context>
chip_gen: v6e
topology: v6e:2x2x1
jax: 0.10.0
libtpu: 0.0.40
codegen_flags: <defaults>
</compile_context>

<pallas_src>
import jax
import jax.numpy as jnp
from jax.experimental import pallas as pl
from jax.experimental.pallas import tpu as pltpu


def edge2edge_kernel(x_ref, wr_ref, wc_ref, b_ref, r_ref, c_ref, o_ref):
    # x_ref  : (nb, C*dim, dim)  free NCHW view: x[b, c*dim+k, j] = x[n, c, k, j]
    # wr_ref : (F, C*dim)        row-conv weights,  wr[f, c*dim+k] = Wr[f, c, 0, k]
    # wc_ref : (F, C*dim)        col-conv weights,  wc[f, c*dim+k] = Wc[f, c, k, 0]
    # b_ref  : (F, 1)            combined bias (br + bc)
    # r_ref  : (dim, dim*dim)    R[i, i*dim+j]  = 1   (row expansion)
    # c_ref  : (dim, dim*dim)    Cm[j, i*dim+j] = 1   (col expansion)
    # o_ref  : (nb, F, dim*dim)  lane-dense output block
    nb, ck, dim = x_ref.shape
    num_f = o_ref.shape[1]
    n_chan = ck // dim

    # vreg-aware filter chunking: an (fc, dim*dim) f32 slab costs
    # ceil(fc/8)*ceil(dim*dim/128) vregs; ~3 such slabs are live (two dot
    # results + sum), so keep each around <= 10 vregs when the shape allows.
    lane_tiles = -(-(dim * dim) // 128)
    f_chunk = min(num_f, max(1, 10 // lane_tiles) * 8)

    def body(b, carry):
        xb = x_ref[b]                                     # (CK, dim)

        # col[f, j] = sum_{c,k} Wc[f,c,k] * x[n,c,k,j]  -- one MXU op over CK.
        col = jnp.dot(wc_ref[...], xb, preferred_element_type=jnp.float32)

        # row[f, i] = sum_{c,k} Wr[f,c,k] * x[n,c,i,k]  -- per-channel XLU
        # transpose of the (dim, dim) slab, then MXU (XLU has slack here).
        row = jnp.zeros((num_f, dim), dtype=jnp.float32)
        for c in range(n_chan):
            xbc = xb[c * dim:(c + 1) * dim, :]            # (dim, dim) = x[n,c,:,:]
            row = row + jnp.dot(wr_ref[:, c * dim:(c + 1) * dim], xbc.T,
                                preferred_element_type=jnp.float32)
        row = row + b_ref[...]                            # fold (br + bc) once

        # Lane-dense broadcast-add: out[f, i*dim+j] = row[f,i] + col[f,j],
        # produced directly in (F, dim*dim) layout via two tiny MXU expansions
        # (each column of R / Cm has exactly one 1) -> unmasked, dense stores.
        for f0 in range(0, num_f, f_chunk):
            f1 = min(num_f, f0 + f_chunk)
            blk = (jnp.dot(row[f0:f1], r_ref[...], preferred_element_type=jnp.float32)
                   + jnp.dot(col[f0:f1], c_ref[...], preferred_element_type=jnp.float32))
            o_ref[b, f0:f1] = blk.astype(o_ref.dtype)
        return carry

    jax.lax.fori_loop(0, nb, body, 0, unroll=True)


def _tpu_caps():
    """Best-effort generation query: (VMEM capacity bytes, is 2-TC part)."""
    vmem_bytes = 64 << 20                     # conservative default (v7x per-TC)
    try:
        info = pltpu.get_tpu_info()
        vmem_bytes = int(getattr(info, "vmem_capacity_bytes", vmem_bytes))
    except Exception:
        pass
    try:
        kind = jax.devices()[0].device_kind.lower()
    except Exception:
        kind = ""
    two_tc = "v7" in kind                     # v7x-class parts: 2 TensorCores/chip
    return vmem_bytes, two_tc


def _choose_block_n(N, C, dim, F, itemsize, vmem_bytes, two_tc):
    """Samples per grid step.  Grid-invariant blocks (weights, bias, R/Cm) are
    counted once; x and out blocks are double-buffered.  Only 2-TC parts keep
    >=2 grid steps (megacore); single-TC parts let nb grow to the budget."""
    ck, p = C * dim, dim * dim
    fixed = (2 * F * ck + F + 2 * dim * p) * 4          # fetched once, resident

    def step_bytes(nb):
        return (nb * ck * dim * itemsize * 2            # x block, double-buffered
                + nb * F * p * itemsize * 2             # out block, double-buffered
                + fixed)

    budget = int(0.70 * vmem_bytes)
    nb = max(1, min(N, 16))
    while nb > 1 and step_bytes(nb) > budget:
        nb -= 1
    if two_tc:
        while nb > 1 and pl.cdiv(N, nb) < 2:
            nb -= 1

    need = step_bytes(nb)
    vmem_limit = max(32 << 20, int(1.25 * need) + (2 << 20))
    vmem_limit = min(vmem_limit, int(0.9 * vmem_bytes))
    vmem_limit = max(vmem_limit, need + (2 << 20))      # never below what we need
    return nb, int(vmem_limit)


def edge2edge(x, w_row, b_row, w_col, b_col):
    """x: (N, C, dim, dim) float32 (NCHW).
    w_row: (F, C, 1, dim), w_col: (F, C, dim, 1), biases: (F,)."""
    N, C, dim, dim2 = x.shape
    assert dim == dim2, "Edge2Edge expects square adjacency matrices"
    F = w_row.shape[0]
    CK = C * dim
    P = dim * dim

    # Single x stream: the col view is a FREE reshape of NCHW.
    x_col = x.reshape(N, CK, dim)                  # [n, c*dim+k, j] = x[n,c,k,j]

    # Conv weights flattened to matmul LHS (free reshapes).
    wr = w_row.reshape(F, CK).astype(jnp.float32)  # wr[f, c*dim+k] = Wr[f,c,0,k]
    wc = w_col.reshape(F, CK).astype(jnp.float32)  # wc[f, c*dim+k] = Wc[f,c,k,0]
    bias = (b_row + b_col).reshape(F, 1).astype(jnp.float32)

    # Constant 0/1 expansion matrices for the lane-dense broadcast (grid-invariant).
    eye = jnp.eye(dim, dtype=jnp.float32)
    r_mat = jnp.repeat(eye, dim, axis=1)           # R[i, i*dim+j]  = 1
    c_mat = jnp.tile(eye, (1, dim))                # Cm[j, i*dim+j] = 1

    vmem_bytes, two_tc = _tpu_caps()
    nb, vmem_limit = _choose_block_n(N, C, dim, F, x.dtype.itemsize,
                                     vmem_bytes, two_tc)
    grid = (pl.cdiv(N, nb),)

    out_flat = pl.pallas_call(
        edge2edge_kernel,
        out_shape=jax.ShapeDtypeStruct((N, F, P), x.dtype),
        grid_spec=pltpu.PrefetchScalarGridSpec(
            num_scalar_prefetch=0,
            grid=grid,
            in_specs=[
                pl.BlockSpec((nb, CK, dim), lambda n: (n, 0, 0)),   # x (single stream)
                pl.BlockSpec((F, CK), lambda n: (0, 0)),            # wr: fetched once
                pl.BlockSpec((F, CK), lambda n: (0, 0)),            # wc: fetched once
                pl.BlockSpec((F, 1), lambda n: (0, 0)),             # bias
                pl.BlockSpec((dim, P), lambda n: (0, 0)),           # R
                pl.BlockSpec((dim, P), lambda n: (0, 0)),           # Cm
            ],
            out_specs=pl.BlockSpec((nb, F, P), lambda n: (n, 0, 0)),  # lane-dense
        ),
        compiler_params=pltpu.CompilerParams(
            dimension_semantics=("parallel",),
            vmem_limit_bytes=vmem_limit,
        ),
    )(x_col, wr, wc, bias, r_mat, c_mat)

    # Free reshape back to NCHW: out[n, f, i*dim+j] -> out[n, f, i, j].
    return out_flat.reshape(N, F, dim, dim)


def edge2edge_reference(x, w_row, b_row, w_col, b_col):
    """Pure-JAX reference replicating the PyTorch forward."""
    row = jnp.einsum("ncik,fck->nfi", x, w_row[:, :, 0, :]) + b_row[None, :, None]
    col = jnp.einsum("nckj,fck->nfj", x, w_col[:, :, :, 0]) + b_col[None, :, None]
    return row[:, :, :, None] + col[:, :, None, :]


if __name__ == "__main__":
    # Small, deterministic config: batch=2, channel=4, dim=16, filters=8
    N, C, DIM, FILT = 2, 4, 16, 8

    key = jax.random.PRNGKey(0)
    kx, kwr, kbr, kwc, kbc = jax.random.split(key, 5)

    x = jax.random.normal(kx, (N, C, DIM, DIM), dtype=jnp.float32)
    # Deterministic parameter init (synthetic; mimics Conv2d weight shapes).
    w_row = jax.random.normal(kwr, (FILT, C, 1, DIM), dtype=jnp.float32) * 0.1
    b_row = jax.random.normal(kbr, (FILT,), dtype=jnp.float32) * 0.1
    w_col = jax.random.normal(kwc, (FILT, C, DIM, 1), dtype=jnp.float32) * 0.1
    b_col = jax.random.normal(kbc, (FILT,), dtype=jnp.float32) * 0.1

    out = edge2edge(x, w_row, b_row, w_col, b_col)
    out = jax.block_until_ready(out)

    ref = edge2edge_reference(x, w_row, b_row, w_col, b_col)
    assert out.shape == (N, FILT, DIM, DIM)
    assert jnp.allclose(out, ref, atol=1e-4, rtol=1e-4), "mismatch vs reference"

    print("KERNEL_OK")
</pallas_src>

<mosaic_0001>
module attributes {stable_mosaic.version = 11 : i64} {
  func.func @edge2edge_kernel(%arg0: i32, %arg1: memref<2x64x16xf32, #tpu.memory_space<vmem>>, %arg2: memref<8x64xf32, #tpu.memory_space<vmem>>, %arg3: memref<8x64xf32, #tpu.memory_space<vmem>>, %arg4: memref<8x1xf32, #tpu.memory_space<vmem>>, %arg5: memref<16x256xf32, #tpu.memory_space<vmem>>, %arg6: memref<16x256xf32, #tpu.memory_space<vmem>>, %arg7: memref<2x8x256xf32, #tpu.memory_space<vmem>>) attributes {dimension_semantics = [#tpu.dimension_semantics<parallel>], iteration_bounds = array<i64: 1>, scalar_prefetch = 0 : i64, scratch_operands = 0 : i64, tpu.core_type = #tpu.core_type<tc>, window_params = [{transform_indices = @transform_0, window_bounds = array<i64: 2, 64, 16>}, {pipeline_mode = #tpu.pipeline_mode<synchronous>, transform_indices = @transform_1, window_bounds = array<i64: 8, 64>}, {pipeline_mode = #tpu.pipeline_mode<synchronous>, transform_indices = @transform_2, window_bounds = array<i64: 8, 64>}, {pipeline_mode = #tpu.pipeline_mode<synchronous>, transform_indices = @transform_3, window_bounds = array<i64: 8, 1>}, {pipeline_mode = #tpu.pipeline_mode<synchronous>, transform_indices = @transform_4, window_bounds = array<i64: 16, 256>}, {pipeline_mode = #tpu.pipeline_mode<synchronous>, transform_indices = @transform_5, window_bounds = array<i64: 16, 256>}, {transform_indices = @transform_6, window_bounds = array<i64: 2, 8, 256>}]} {
    %c0_i32 = arith.constant 0 : i32
    %0 = arith.index_cast %c0_i32 : i32 to index
    %c0 = arith.constant 0 : index
    %c0_0 = arith.constant 0 : index
    %1 = vector.load %arg1[%0, %c0, %c0_0] : memref<2x64x16xf32, #tpu.memory_space<vmem>>, vector<1x64x16xf32>
    %2 = vector.shape_cast %1 : vector<1x64x16xf32> to vector<64x16xf32>
    %c0_1 = arith.constant 0 : index
    %c0_2 = arith.constant 0 : index
    %3 = vector.load %arg3[%c0_1, %c0_2] : memref<8x64xf32, #tpu.memory_space<vmem>>, vector<8x64xf32>
    %cst = arith.constant dense<0.000000e+00> : vector<8x16xf32>
    %4 = tpu.matmul %3, %2, %cst {dimension_numbers = #tpu.dot_dimension_numbers<[1], [0], [0], [1], [0, 0, 1, 1], [], []>} : vector<8x64xf32>, vector<64x16xf32>, vector<8x16xf32> -> vector<8x16xf32>
    %cst_3 = arith.constant 0.000000e+00 : f32
    %5 = vector.broadcast %cst_3 : f32 to vector<8x16xf32>
    %6 = vector.extract_strided_slice %2 {offsets = [0, 0], sizes = [16, 16], strides = [1, 1]} : vector<64x16xf32> to vector<16x16xf32>
    %c0_4 = arith.constant 0 : index
    %c0_5 = arith.constant 0 : index
    %7 = vector.load %arg2[%c0_4, %c0_5] : memref<8x64xf32, #tpu.memory_space<vmem>>, vector<8x16xf32>
    %8 = tpu.transpose %6, [1, 0] : vector<16x16xf32> -> vector<16x16xf32>
    %cst_6 = arith.constant dense<0.000000e+00> : vector<8x16xf32>
    %9 = tpu.matmul %7, %8, %cst_6 {dimension_numbers = #tpu.dot_dimension_numbers<[1], [0], [0], [1], [0, 0, 1, 1], [], []>} : vector<8x16xf32>, vector<16x16xf32>, vector<8x16xf32> -> vector<8x16xf32>
    %10 = arith.addf %5, %9 : vector<8x16xf32>
    %11 = vector.extract_strided_slice %2 {offsets = [16, 0], sizes = [16, 16], strides = [1, 1]} : vector<64x16xf32> to vector<16x16xf32>
    %c0_7 = arith.constant 0 : index
    %c16 = arith.constant 16 : index
    %12 = vector.load %arg2[%c0_7, %c16] : memref<8x64xf32, #tpu.memory_space<vmem>>, vector<8x16xf32>
    %13 = tpu.transpose %11, [1, 0] : vector<16x16xf32> -> vector<16x16xf32>
    %cst_8 = arith.constant dense<0.000000e+00> : vector<8x16xf32>
    %14 = tpu.matmul %12, %13, %cst_8 {dimension_numbers = #tpu.dot_dimension_numbers<[1], [0], [0], [1], [0, 0, 1, 1], [], []>} : vector<8x16xf32>, vector<16x16xf32>, vector<8x16xf32> -> vector<8x16xf32>
    %15 = arith.addf %10, %14 : vector<8x16xf32>
    %16 = vector.extract_strided_slice %2 {offsets = [32, 0], sizes = [16, 16], strides = [1, 1]} : vector<64x16xf32> to vector<16x16xf32>
    %c0_9 = arith.constant 0 : index
    %c32 = arith.constant 32 : index
    %17 = vector.load %arg2[%c0_9, %c32] : memref<8x64xf32, #tpu.memory_space<vmem>>, vector<8x16xf32>
    %18 = tpu.transpose %16, [1, 0] : vector<16x16xf32> -> vector<16x16xf32>
    %cst_10 = arith.constant dense<0.000000e+00> : vector<8x16xf32>
    %19 = tpu.matmul %17, %18, %cst_10 {dimension_numbers = #tpu.dot_dimension_numbers<[1], [0], [0], [1], [0, 0, 1, 1], [], []>} : vector<8x16xf32>, vector<16x16xf32>, vector<8x16xf32> -> vector<8x16xf32>
    %20 = arith.addf %15, %19 : vector<8x16xf32>
    %21 = vector.extract_strided_slice %2 {offsets = [48, 0], sizes = [16, 16], strides = [1, 1]} : vector<64x16xf32> to vector<16x16xf32>
    %c0_11 = arith.constant 0 : index
    %c48 = arith.constant 48 : index
    %22 = vector.load %arg2[%c0_11, %c48] : memref<8x64xf32, #tpu.memory_space<vmem>>, vector<8x16xf32>
    %23 = tpu.transpose %21, [1, 0] : vector<16x16xf32> -> vector<16x16xf32>
    %cst_12 = arith.constant dense<0.000000e+00> : vector<8x16xf32>
    %24 = tpu.matmul %22, %23, %cst_12 {dimension_numbers = #tpu.dot_dimension_numbers<[1], [0], [0], [1], [0, 0, 1, 1], [], []>} : vector<8x16xf32>, vector<16x16xf32>, vector<8x16xf32> -> vector<8x16xf32>
    %25 = arith.addf %20, %24 : vector<8x16xf32>
    %c0_13 = arith.constant 0 : index
    %c0_14 = arith.constant 0 : index
    %26 = vector.load %arg4[%c0_13, %c0_14] : memref<8x1xf32, #tpu.memory_space<vmem>>, vector<8x1xf32>
    %27 = vector.broadcast %26 : vector<8x1xf32> to vector<8x16xf32>
    %28 = arith.addf %25, %27 : vector<8x16xf32>
    %c0_15 = arith.constant 0 : index
    %c0_16 = arith.constant 0 : index
    %29 = vector.load %arg5[%c0_15, %c0_16] : memref<16x256xf32, #tpu.memory_space<vmem>>, vector<16x256xf32>
    %cst_17 = arith.constant dense<0.000000e+00> : vector<8x256xf32>
    %30 = tpu.matmul %28, %29, %cst_17 {dimension_numbers = #tpu.dot_dimension_numbers<[1], [0], [0], [1], [0, 0, 1, 1], [], []>} : vector<8x16xf32>, vector<16x256xf32>, vector<8x256xf32> -> vector<8x256xf32>
    %c0_18 = arith.constant 0 : index
    %c0_19 = arith.constant 0 : index
    %31 = vector.load %arg6[%c0_18, %c0_19] : memref<16x256xf32, #tpu.memory_space<vmem>>, vector<16x256xf32>
    %cst_20 = arith.constant dense<0.000000e+00> : vector<8x256xf32>
    %32 = tpu.matmul %4, %31, %cst_20 {dimension_numbers = #tpu.dot_dimension_numbers<[1], [0], [0], [1], [0, 0, 1, 1], [], []>} : vector<8x16xf32>, vector<16x256xf32>, vector<8x256xf32> -> vector<8x256xf32>
    %33 = arith.addf %30, %32 : vector<8x256xf32>
    %34 = arith.index_cast %c0_i32 : i32 to index
    %c0_21 = arith.constant 0 : index
    %c0_22 = arith.constant 0 : index
    %35 = vector.load %arg7[%34, %c0_21, %c0_22] : memref<2x8x256xf32, #tpu.memory_space<vmem>>, vector<1x8x256xf32>
    %36 = vector.shape_cast %35 : vector<1x8x256xf32> to vector<8x256xf32>
    %37 = vector.shape_cast %33 : vector<8x256xf32> to vector<1x8x256xf32>
    tpu.vector_store %arg7[%34, %c0_21, %c0_22], %37 {strides = array<i32>} : memref<2x8x256xf32, #tpu.memory_space<vmem>>, vector<1x8x256xf32>,
    %c1_i32 = arith.constant 1 : i32
    %38 = arith.index_cast %c1_i32 : i32 to index
    %c0_23 = arith.constant 0 : index
    %c0_24 = arith.constant 0 : index
    %39 = vector.load %arg1[%38, %c0_23, %c0_24] : memref<2x64x16xf32, #tpu.memory_space<vmem>>, vector<1x64x16xf32>
    %40 = vector.shape_cast %39 : vector<1x64x16xf32> to vector<64x16xf32>
    %c0_25 = arith.constant 0 : index
    %c0_26 = arith.constant 0 : index
    %41 = vector.load %arg3[%c0_25, %c0_26] : memref<8x64xf32, #tpu.memory_space<vmem>>, vector<8x64xf32>
    %cst_27 = arith.constant dense<0.000000e+00> : vector<8x16xf32>
    %42 = tpu.matmul %41, %40, %cst_27 {dimension_numbers = #tpu.dot_dimension_numbers<[1], [0], [0], [1], [0, 0, 1, 1], [], []>} : vector<8x64xf32>, vector<64x16xf32>, vector<8x16xf32> -> vector<8x16xf32>
    %cst_28 = arith.constant 0.000000e+00 : f32
    %43 = vector.broadcast %cst_28 : f32 to vector<8x16xf32>
    %44 = vector.extract_strided_slice %40 {offsets = [0, 0], sizes = [16, 16], strides = [1, 1]} : vector<64x16xf32> to vector<16x16xf32>
    %c0_29 = arith.constant 0 : index
    %c0_30 = arith.constant 0 : index
    %45 = vector.load %arg2[%c0_29, %c0_30] : memref<8x64xf32, #tpu.memory_space<vmem>>, vector<8x16xf32>
    %46 = tpu.transpose %44, [1, 0] : vector<16x16xf32> -> vector<16x16xf32>
    %cst_31 = arith.constant dense<0.000000e+00> : vector<8x16xf32>
    %47 = tpu.matmul %45, %46, %cst_31 {dimension_numbers = #tpu.dot_dimension_numbers<[1], [0], [0], [1], [0, 0, 1, 1], [], []>} : vector<8x16xf32>, vector<16x16xf32>, vector<8x16xf32> -> vector<8x16xf32>
    %48 = arith.addf %43, %47 : vector<8x16xf32>
    %49 = vector.extract_strided_slice %40 {offsets = [16, 0], sizes = [16, 16], strides = [1, 1]} : vector<64x16xf32> to vector<16x16xf32>
    %c0_32 = arith.constant 0 : index
    %c16_33 = arith.constant 16 : index
    %50 = vector.load %arg2[%c0_32, %c16_33] : memref<8x64xf32, #tpu.memory_space<vmem>>, vector<8x16xf32>
    %51 = tpu.transpose %49, [1, 0] : vector<16x16xf32> -> vector<16x16xf32>
    %cst_34 = arith.constant dense<0.000000e+00> : vector<8x16xf32>
    %52 = tpu.matmul %50, %51, %cst_34 {dimension_numbers = #tpu.dot_dimension_numbers<[1], [0], [0], [1], [0, 0, 1, 1], [], []>} : vector<8x16xf32>, vector<16x16xf32>, vector<8x16xf32> -> vector<8x16xf32>
    %53 = arith.addf %48, %52 : vector<8x16xf32>
    %54 = vector.extract_strided_slice %40 {offsets = [32, 0], sizes = [16, 16], strides = [1, 1]} : vector<64x16xf32> to vector<16x16xf32>
    %c0_35 = arith.constant 0 : index
    %c32_36 = arith.constant 32 : index
    %55 = vector.load %arg2[%c0_35, %c32_36] : memref<8x64xf32, #tpu.memory_space<vmem>>, vector<8x16xf32>
    %56 = tpu.transpose %54, [1, 0] : vector<16x16xf32> -> vector<16x16xf32>
    %cst_37 = arith.constant dense<0.000000e+00> : vector<8x16xf32>
    %57 = tpu.matmul %55, %56, %cst_37 {dimension_numbers = #tpu.dot_dimension_numbers<[1], [0], [0], [1], [0, 0, 1, 1], [], []>} : vector<8x16xf32>, vector<16x16xf32>, vector<8x16xf32> -> vector<8x16xf32>
    %58 = arith.addf %53, %57 : vector<8x16xf32>
    %59 = vector.extract_strided_slice %40 {offsets = [48, 0], sizes = [16, 16], strides = [1, 1]} : vector<64x16xf32> to vector<16x16xf32>
    %c0_38 = arith.constant 0 : index
    %c48_39 = arith.constant 48 : index
    %60 = vector.load %arg2[%c0_38, %c48_39] : memref<8x64xf32, #tpu.memory_space<vmem>>, vector<8x16xf32>
    %61 = tpu.transpose %59, [1, 0] : vector<16x16xf32> -> vector<16x16xf32>
    %cst_40 = arith.constant dense<0.000000e+00> : vector<8x16xf32>
    %62 = tpu.matmul %60, %61, %cst_40 {dimension_numbers = #tpu.dot_dimension_numbers<[1], [0], [0], [1], [0, 0, 1, 1], [], []>} : vector<8x16xf32>, vector<16x16xf32>, vector<8x16xf32> -> vector<8x16xf32>
    %63 = arith.addf %58, %62 : vector<8x16xf32>
    %c0_41 = arith.constant 0 : index
    %c0_42 = arith.constant 0 : index
    %64 = vector.load %arg4[%c0_41, %c0_42] : memref<8x1xf32, #tpu.memory_space<vmem>>, vector<8x1xf32>
    %65 = vector.broadcast %64 : vector<8x1xf32> to vector<8x16xf32>
    %66 = arith.addf %63, %65 : vector<8x16xf32>
    %c0_43 = arith.constant 0 : index
    %c0_44 = arith.constant 0 : index
    %67 = vector.load %arg5[%c0_43, %c0_44] : memref<16x256xf32, #tpu.memory_space<vmem>>, vector<16x256xf32>
    %cst_45 = arith.constant dense<0.000000e+00> : vector<8x256xf32>
    %68 = tpu.matmul %66, %67, %cst_45 {dimension_numbers = #tpu.dot_dimension_numbers<[1], [0], [0], [1], [0, 0, 1, 1], [], []>} : vector<8x16xf32>, vector<16x256xf32>, vector<8x256xf32> -> vector<8x256xf32>
    %c0_46 = arith.constant 0 : index
    %c0_47 = arith.constant 0 : index
    %69 = vector.load %arg6[%c0_46, %c0_47] : memref<16x256xf32, #tpu.memory_space<vmem>>, vector<16x256xf32>
    %cst_48 = arith.constant dense<0.000000e+00> : vector<8x256xf32>
    %70 = tpu.matmul %42, %69, %cst_48 {dimension_numbers = #tpu.dot_dimension_numbers<[1], [0], [0], [1], [0, 0, 1, 1], [], []>} : vector<8x16xf32>, vector<16x256xf32>, vector<8x256xf32> -> vector<8x256xf32>
    %71 = arith.addf %68, %70 : vector<8x256xf32>
    %72 = arith.index_cast %c1_i32 : i32 to index
    %c0_49 = arith.constant 0 : index
    %c0_50 = arith.constant 0 : index
    %73 = vector.load %arg7[%72, %c0_49, %c0_50] : memref<2x8x256xf32, #tpu.memory_space<vmem>>, vector<1x8x256xf32>
    %74 = vector.shape_cast %73 : vector<1x8x256xf32> to vector<8x256xf32>
    %75 = vector.shape_cast %71 : vector<8x256xf32> to vector<1x8x256xf32>
    tpu.vector_store %arg7[%72, %c0_49, %c0_50], %75 {strides = array<i32>} : memref<2x8x256xf32, #tpu.memory_space<vmem>>, vector<1x8x256xf32>,
    %c2_i32 = arith.constant 2 : i32
    return
  }
  func.func @transform_0(%arg0: i32) -> (i32, i32, i32) {
    %c0_i32 = arith.constant 0 : i32
    %c0_i32_0 = arith.constant 0 : i32
    %c0_i32_1 = arith.constant 0 : i32
    return %arg0, %c0_i32, %c0_i32_0 : i32, i32, i32
  }
  func.func @transform_1(%arg0: i32) -> (i32, i32) {
    %c0_i32 = arith.constant 0 : i32
    %c0_i32_0 = arith.constant 0 : i32
    %c0_i32_1 = arith.constant 0 : i32
    return %c0_i32, %c0_i32_0 : i32, i32
  }
  func.func @transform_2(%arg0: i32) -> (i32, i32) {
    %c0_i32 = arith.constant 0 : i32
    %c0_i32_0 = arith.constant 0 : i32
    %c0_i32_1 = arith.constant 0 : i32
    return %c0_i32, %c0_i32_0 : i32, i32
  }
  func.func @transform_3(%arg0: i32) -> (i32, i32) {
    %c0_i32 = arith.constant 0 : i32
    %c0_i32_0 = arith.constant 0 : i32
    %c0_i32_1 = arith.constant 0 : i32
    return %c0_i32, %c0_i32_0 : i32, i32
  }
  func.func @transform_4(%arg0: i32) -> (i32, i32) {
    %c0_i32 = arith.constant 0 : i32
    %c0_i32_0 = arith.constant 0 : i32
    %c0_i32_1 = arith.constant 0 : i32
    return %c0_i32, %c0_i32_0 : i32, i32
  }
  func.func @transform_5(%arg0: i32) -> (i32, i32) {
    %c0_i32 = arith.constant 0 : i32
    %c0_i32_0 = arith.constant 0 : i32
    %c0_i32_1 = arith.constant 0 : i32
    return %c0_i32, %c0_i32_0 : i32, i32
  }
  func.func @transform_6(%arg0: i32) -> (i32, i32, i32) {
    %c0_i32 = arith.constant 0 : i32
    %c0_i32_0 = arith.constant 0 : i32
    %c0_i32_1 = arith.constant 0 : i32
    return %arg0, %c0_i32, %c0_i32_0 : i32, i32, i32
  }
}

</mosaic_0001>

<llo_original>
// kernel: tpu_custom_call.1
$region0: #{tpu_custom_call.1}
  #allocation0 [shape = 'u32[]', space=smem, size = 0x4, offset = 0x4, fixed_abs, tag = 'smem constant byte address 0x4 - core index']
  #allocation1 [shape = 'u32[144,128]{1,0:T(1,128)}', space=vmem, size = 0x12000, scoped, tag = 'internal scratch']
  %s0 = inlined_call_operand.vmem [shape: f32[2,64,16], index: 0, kind: input, shape index: {}]
  %s1 = inlined_call_operand.vmem [shape: f32[8,64], index: 1, kind: input, shape index: {}]
  %s2 = inlined_call_operand.vmem [shape: f32[8,64], index: 2, kind: input, shape index: {}]
  %s3 = inlined_call_operand.vmem [shape: f32[8,1], index: 3, kind: input, shape index: {}]
  %s4 = inlined_call_operand.vmem [shape: f32[16,256], index: 4, kind: input, shape index: {}]
  %s5 = inlined_call_operand.vmem [shape: f32[16,256], index: 5, kind: input, shape index: {}]
  %s6 = inlined_call_operand.hbm [shape: f32[2,8,256], index: 6, kind: output, shape index: {}]
  %s7 = sld [smem:[#allocation0]]
  $region34: #{tpu_custom_call.1} parent=0
    _
  %s9 = ssub.s32 1, %s7
  %s10 = scalar_select 0, %s9, %s7
  $region1: #{tpu_custom_call.1} parent=0
    #allocation2 [shape = 'u8[16384]{0}', space=vmem, size = 0x4000, scoped, tag = 'output window, operand 0, single buffered']
    #allocation3 [shape = 's32[1]{0}', space=sflag, size = 0x4, scoped, tag = 'scoped memory for tpu_custom_call.1']
    %11 = vsyncpa [#allocation3], 0
    // Predicated region
    $region2: #{tpu_custom_call.1} parent=1 // pred_check
      _
    $region3: #{tpu_custom_call.1} parent=1 // pred_check_branch
      %13 = sbr.rel (0) target = $region5
    $region4: #{tpu_custom_call.1} parent=1 // pred_region
      _
    $region5: #{tpu_custom_call.1} parent=1 // pred_fallthru
      _
    // Predicated region
    $region6: #{tpu_custom_call.1} parent=1 // pred_check
      _
    $region7: #{tpu_custom_call.1} parent=1 // pred_check_branch
      %15 = sbr.rel (0) target = $region9
    $region8: #{tpu_custom_call.1} parent=1 // pred_region
      _
    $region9: #{tpu_custom_call.1} parent=1 // pred_fallthru
      _
    // Predicated region
    $region10: #{tpu_custom_call.1} parent=1 // pred_check
      _
    $region11: #{tpu_custom_call.1} parent=1 // pred_check_branch
      %17 = sbr.rel (0) target = $region13
    $region12: #{tpu_custom_call.1} parent=1 // pred_region
      _
    $region13: #{tpu_custom_call.1} parent=1 // pred_fallthru
      _
    // Predicated region
    $region14: #{tpu_custom_call.1} parent=1 // pred_check
      _
    $region15: #{tpu_custom_call.1} parent=1 // pred_check_branch
      %19 = sbr.rel (0) target = $region17
    $region16: #{tpu_custom_call.1} parent=1 // pred_region
      _
    $region17: #{tpu_custom_call.1} parent=1 // pred_fallthru
      _
    // Predicated region
    $region18: #{tpu_custom_call.1} parent=1 // pred_check
      _
    $region19: #{tpu_custom_call.1} parent=1 // pred_check_branch
      %21 = sbr.rel (0) target = $region21
    $region20: #{tpu_custom_call.1} parent=1 // pred_region
      _
    $region21: #{tpu_custom_call.1} parent=1 // pred_fallthru
      _
    // Predicated region
    $region22: #{tpu_custom_call.1} parent=1 // pred_check
      _
    $region23: #{tpu_custom_call.1} parent=1 // pred_check_branch
      %23 = sbr.rel (0) target = $region25
    $region24: #{tpu_custom_call.1} parent=1 // pred_region
      _
    $region25: #{tpu_custom_call.1} parent=1 // pred_fallthru
      _
    %v24 = vld [vmem:[%s0] sm:$0xff]
    %v25 = vld [vmem:[%s0 + $0x8] sm:$0xff]
    %v26 = vld [vmem:[%s0 + $0x10] sm:$0xff]
    %v27 = vld [vmem:[%s0 + $0x18] sm:$0xff]
    %v28 = vld [vmem:[%s0 + $0x20] sm:$0xff]
    %v29 = vld [vmem:[%s0 + $0x28] sm:$0xff]
    %v30 = vld [vmem:[%s0 + $0x30] sm:$0xff]
    %v31 = vld [vmem:[%s0 + $0x38] sm:$0xff]
    %v32 = vld [vmem:[%s2] sm:$0xff]
    %vm33 = vcmask 523264
    %v35 = vsel %vm33, %v32, 0
    %37 = vmatprep.subr.mxu0 0.0
    %38 = vmatpush1.msra.mxu0 0.0
    %39 = vmatprep.subr.mxu0 0.0
    %40 = vmatpush1.msra.mxu0 0.0
    %41 = vmatprep.subr.mxu0 0.0
    %42 = vmatpush1.msra.mxu0 0.0
    %43 = vmatprep.subr.mxu0 0.0
    %44 = vmatpush1.msra.mxu0 0.0
    %45 = vmatprep.subr.mxu0 0.0
    %46 = vmatpush1.msra.mxu0 0.0
    %47 = vmatprep.subr.mxu0 0.0
    %48 = vmatpush1.msra.mxu0 0.0
    %49 = vmatprep.subr.mxu0 0.0
    %50 = vmatpush1.msra.mxu0 0.0
    %51 = vmatprep.subr.mxu0 0.0
    %52 = vmatpush1.msra.mxu0 0.0
    %53 = vmatprep.subr.mxu0 0.0
    %54 = vmatpush1.msra.mxu0 %v31
    %55 = vmatprep.subr.mxu0 0.0
    %56 = vmatpush1.msra.mxu0 %v30
    %57 = vmatprep.subr.mxu0 0.0
    %58 = vmatpush1.msra.mxu0 %v29
    %59 = vmatprep.subr.mxu0 0.0
    %60 = vmatpush1.msra.mxu0 %v28
    %61 = vmatprep.subr.mxu0 0.0
    %62 = vmatpush1.msra.mxu0 %v27
    %63 = vmatprep.subr.mxu0 0.0
    %64 = vmatpush1.msra.mxu0 %v26
    %65 = vmatprep.subr.mxu0 0.0
    %66 = vmatpush1.msra.mxu0 %v25
    %67 = vmatprep.subr.mxu0 0.0
    %68 = vmatpush1.msra.mxu0 %v24
    %69 = vmatprep.subr.mxu0 0.0
    %70 = vmatpush2.msra.mxu0 0.0
    %71 = vmatprep.subr.mxu0 0.0
    %72 = vmatpush2.msra.mxu0 0.0
    %73 = vmatprep.subr.mxu0 0.0
    %74 = vmatpush2.msra.mxu0 0.0
    %75 = vmatprep.subr.mxu0 0.0
    %76 = vmatpush2.msra.mxu0 0.0
    %77 = vmatprep.subr.mxu0 0.0
    %78 = vmatpush2.msra.mxu0 0.0
    %79 = vmatprep.subr.mxu0 0.0
    %80 = vmatpush2.msra.mxu0 0.0
    %81 = vmatprep.subr.mxu0 0.0
    %82 = vmatpush2.msra.mxu0 0.0
    %83 = vmatprep.subr.mxu0 0.0
    %84 = vmatpush2.msra.mxu0 0.0
    %85 = vmatprep.subr.mxu0 0.0
    %86 = vmatpush2.msra.mxu0 0.0
    %87 = vmatprep.subr.mxu0 0.0
    %88 = vmatpush2.msra.mxu0 0.0
    %89 = vmatprep.subr.mxu0 0.0
    %90 = vmatpush2.msra.mxu0 0.0
    %91 = vmatprep.subr.mxu0 0.0
    %92 = vmatpush2.msra.mxu0 0.0
    %93 = vmatprep.subr.mxu0 0.0
    %94 = vmatpush2.msra.mxu0 0.0
    %95 = vmatprep.subr.mxu0 0.0
    %96 = vmatpush2.msra.mxu0 0.0
    %97 = vmatprep.subr.mxu0 0.0
    %98 = vmatpush2.msra.mxu0 0.0
    %99 = vmatprep.subr.mxu0 0.0
    %100 = vmatpush2.msra.mxu0 0.0
    %101 = vmatprep.mubr.f32.mxu0 0.0
    %102 = vmatmul.mubr.f32.gmra.mxu0 %v35
    %v103 = vpop.f32.mrf.mxu0
    %v104 = vadd.f32 0.0, %v103
    %v105 = vpop.f32.mrf.mxu0
    %106 = vdwg.mxu0
    %v107 = vld [vmem:[%s1] sm:$0xff]
    %109 = vrot.lane.b32.xlu0 %v107, 112
    %v110 = vpop.permute.xlu0 %109
    %vm111 = vcmask 130048
    %v112 = vsel %vm111, %v110, 0
    %v115 = vsel %vm111, %v26, 0
    %v118 = vsel %vm111, %v27, 0
    %120 = vmatprep.subr.mxu0 0.0
    %121 = vmatpush1.xpose.msra.mxu0 0.0
    %122 = vmatprep.subr.mxu0 0.0
    %123 = vmatpush1.xpose.msra.mxu0 0.0
    %124 = vmatprep.subr.mxu0 0.0
    %125 = vmatpush1.xpose.msra.mxu0 0.0
    %126 = vmatprep.subr.mxu0 0.0
    %127 = vmatpush1.xpose.msra.mxu0 0.0
    %128 = vmatprep.subr.mxu0 0.0
    %129 = vmatpush1.xpose.msra.mxu0 0.0
    %130 = vmatprep.subr.mxu0 0.0
    %131 = vmatpush1.xpose.msra.mxu0 0.0
    %132 = vmatprep.subr.mxu0 0.0
    %133 = vmatpush1.xpose.msra.mxu0 0.0
    %134 = vmatprep.subr.mxu0 0.0
    %135 = vmatpush1.xpose.msra.mxu0 0.0
    %136 = vmatprep.subr.mxu0 0.0
    %137 = vmatpush1.xpose.msra.mxu0 0.0
    %138 = vmatprep.subr.mxu0 0.0
    %139 = vmatpush1.xpose.msra.mxu0 0.0
    %140 = vmatprep.subr.mxu0 0.0
    %141 = vmatpush1.xpose.msra.mxu0 0.0
    %142 = vmatprep.subr.mxu0 0.0
    %143 = vmatpush1.xpose.msra.mxu0 0.0
    %144 = vmatprep.subr.mxu0 0.0
    %145 = vmatpush1.xpose.msra.mxu0 0.0
    %146 = vmatprep.subr.mxu0 0.0
    %147 = vmatpush1.xpose.msra.mxu0 0.0
    %148 = vmatprep.subr.mxu0 0.0
    %149 = vmatpush1.xpose.msra.mxu0 %v118
    %150 = vmatprep.subr.mxu0 0.0
    %151 = vmatpush1.xpose.msra.mxu0 %v115
    %152 = vmatprep.subr.mxu0 0.0
    %153 = vmatpush2.xpose.msra.mxu0 0.0
    %154 = vmatprep.subr.mxu0 0.0
    %155 = vmatpush2.xpose.msra.mxu0 0.0
    %156 = vmatprep.subr.mxu0 0.0
    %157 = vmatpush2.xpose.msra.mxu0 0.0
    %158 = vmatprep.subr.mxu0 0.0
    %159 = vmatpush2.xpose.msra.mxu0 0.0
    %160 = vmatprep.subr.mxu0 0.0
    %161 = vmatpush2.xpose.msra.mxu0 0.0
    %162 = vmatprep.subr.mxu0 0.0
    %163 = vmatpush2.xpose.msra.mxu0 0.0
    %164 = vmatprep.subr.mxu0 0.0
    %165 = vmatpush2.xpose.msra.mxu0 0.0
    %166 = vmatprep.subr.mxu0 0.0
    %167 = vmatpush2.xpose.msra.mxu0 0.0
    %168 = vmatprep.subr.mxu0 0.0
    %169 = vmatpush2.xpose.msra.mxu0 0.0
    %170 = vmatprep.subr.mxu0 0.0
    %171 = vmatpush2.xpose.msra.mxu0 0.0
    %172 = vmatprep.subr.mxu0 0.0
    %173 = vmatpush2.xpose.msra.mxu0 0.0
    %174 = vmatprep.subr.mxu0 0.0
    %175 = vmatpush2.xpose.msra.mxu0 0.0
    %176 = vmatprep.subr.mxu0 0.0
    %177 = vmatpush2.xpose.msra.mxu0 0.0
    %178 = vmatprep.subr.mxu0 0.0
    %179 = vmatpush2.xpose.msra.mxu0 0.0
    %180 = vmatprep.subr.mxu0 0.0
    %181 = vmatpush2.xpose.msra.mxu0 0.0
    %182 = vmatprep.subr.mxu0 0.0
    %183 = vmatpush2.xpose.msra.mxu0 0.0
    %184 = vmatprep.mubr.f32.mxu0 0.0
    %185 = vmatmul.mubr.f32.gmra.mxu0 %v112
    %v186 = vpop.f32.mrf.mxu0
    %v187 = vadd.f32 0.0, %v186
    %v188 = vpop.f32.mrf.mxu0
    %189 = vdwg.mxu0
    %v190 = vsel %vm111, %v107, 0
    %v193 = vsel %vm111, %v24, 0
    %v196 = vsel %vm111, %v25, 0
    %198 = vmatprep.subr.mxu0 0.0
    %199 = vmatpush1.xpose.msra.mxu0 0.0
    %200 = vmatprep.subr.mxu0 0.0
    %201 = vmatpush1.xpose.msra.mxu0 0.0
    %202 = vmatprep.subr.mxu0 0.0
    %203 = vmatpush1.xpose.msra.mxu0 0.0
    %204 = vmatprep.subr.mxu0 0.0
    %205 = vmatpush1.xpose.msra.mxu0 0.0
    %206 = vmatprep.subr.mxu0 0.0
    %207 = vmatpush1.xpose.msra.mxu0 0.0
    %208 = vmatprep.subr.mxu0 0.0
    %209 = vmatpush1.xpose.msra.mxu0 0.0
    %210 = vmatprep.subr.mxu0 0.0
    %211 = vmatpush1.xpose.msra.mxu0 0.0
    %212 = vmatprep.subr.mxu0 0.0
    %213 = vmatpush1.xpose.msra.mxu0 0.0
    %214 = vmatprep.subr.mxu0 0.0
    %215 = vmatpush1.xpose.msra.mxu0 0.0
    %216 = vmatprep.subr.mxu0 0.0
    %217 = vmatpush1.xpose.msra.mxu0 0.0
    %218 = vmatprep.subr.mxu0 0.0
    %219 = vmatpush1.xpose.msra.mxu0 0.0
    %220 = vmatprep.subr.mxu0 0.0
    %221 = vmatpush1.xpose.msra.mxu0 0.0
    %222 = vmatprep.subr.mxu0 0.0
    %223 = vmatpush1.xpose.msra.mxu0 0.0
    %224 = vmatprep.subr.mxu0 0.0
    %225 = vmatpush1.xpose.msra.mxu0 0.0
    %226 = vmatprep.subr.mxu0 0.0
    %227 = vmatpush1.xpose.msra.mxu0 %v196
    %228 = vmatprep.subr.mxu0 0.0
    %229 = vmatpush1.xpose.msra.mxu0 %v193
    %230 = vmatprep.subr.mxu0 0.0
    %231 = vmatpush2.xpose.msra.mxu0 0.0
    %232 = vmatprep.subr.mxu0 0.0
    %233 = vmatpush2.xpose.msra.mxu0 0.0
    %234 = vmatprep.subr.mxu0 0.0
    %235 = vmatpush2.xpose.msra.mxu0 0.0
    %236 = vmatprep.subr.mxu0 0.0
    %237 = vmatpush2.xpose.msra.mxu0 0.0
    %238 = vmatprep.subr.mxu0 0.0
    %239 = vmatpush2.xpose.msra.mxu0 0.0
    %240 = vmatprep.subr.mxu0 0.0
    %241 = vmatpush2.xpose.msra.mxu0 0.0
    %242 = vmatprep.subr.mxu0 0.0
    %243 = vmatpush2.xpose.msra.mxu0 0.0
    %244 = vmatprep.subr.mxu0 0.0
    %245 = vmatpush2.xpose.msra.mxu0 0.0
    %246 = vmatprep.subr.mxu0 0.0
    %247 = vmatpush2.xpose.msra.mxu0 0.0
    %248 = vmatprep.subr.mxu0 0.0
    %249 = vmatpush2.xpose.msra.mxu0 0.0
    %250 = vmatprep.subr.mxu0 0.0
    %251 = vmatpush2.xpose.msra.mxu0 0.0
    %252 = vmatprep.subr.mxu0 0.0
    %253 = vmatpush2.xpose.msra.mxu0 0.0
    %254 = vmatprep.subr.mxu0 0.0
    %255 = vmatpush2.xpose.msra.mxu0 0.0
    %256 = vmatprep.subr.mxu0 0.0
    %257 = vmatpush2.xpose.msra.mxu0 0.0
    %258 = vmatprep.subr.mxu0 0.0
    %259 = vmatpush2.xpose.msra.mxu0 0.0
    %260 = vmatprep.subr.mxu0 0.0
    %261 = vmatpush2.xpose.msra.mxu0 0.0
    %262 = vmatprep.mubr.f32.mxu0 0.0
    %263 = vmatmul.mubr.f32.gmra.mxu0 %v190
    %v264 = vpop.f32.mrf.mxu0
    %v265 = vadd.f32 %v187, %v264
    %v266 = vpop.f32.mrf.mxu0
    %267 = vdwg.mxu0
    %268 = vrot.lane.b32.xlu0 %v107, 96
    %v269 = vpop.permute.xlu0 %268
    %v270 = vsel %vm111, %v269, 0
    %v273 = vsel %vm111, %v28, 0
    %v276 = vsel %vm111, %v29, 0
    %278 = vmatprep.subr.mxu0 0.0
    %279 = vmatpush1.xpose.msra.mxu0 0.0
    %280 = vmatprep.subr.mxu0 0.0
    %281 = vmatpush1.xpose.msra.mxu0 0.0
    %282 = vmatprep.subr.mxu0 0.0
    %283 = vmatpush1.xpose.msra.mxu0 0.0
    %284 = vmatprep.subr.mxu0 0.0
    %285 = vmatpush1.xpose.msra.mxu0 0.0
    %286 = vmatprep.subr.mxu0 0.0
    %287 = vmatpush1.xpose.msra.mxu0 0.0
    %288 = vmatprep.subr.mxu0 0.0
    %289 = vmatpush1.xpose.msra.mxu0 0.0
    %290 = vmatprep.subr.mxu0 0.0
    %291 = vmatpush1.xpose.msra.mxu0 0.0
    %292 = vmatprep.subr.mxu0 0.0
    %293 = vmatpush1.xpose.msra.mxu0 0.0
    %294 = vmatprep.subr.mxu0 0.0
    %295 = vmatpush1.xpose.msra.mxu0 0.0
    %296 = vmatprep.subr.mxu0 0.0
    %297 = vmatpush1.xpose.msra.mxu0 0.0
    %298 = vmatprep.subr.mxu0 0.0
    %299 = vmatpush1.xpose.msra.mxu0 0.0
    %300 = vmatprep.subr.mxu0 0.0
    %301 = vmatpush1.xpose.msra.mxu0 0.0
    %302 = vmatprep.subr.mxu0 0.0
    %303 = vmatpush1.xpose.msra.mxu0 0.0
    %304 = vmatprep.subr.mxu0 0.0
    %305 = vmatpush1.xpose.msra.mxu0 0.0
    %306 = vmatprep.subr.mxu0 0.0
    %307 = vmatpush1.xpose.msra.mxu0 %v276
    %308 = vmatprep.subr.mxu0 0.0
    %309 = vmatpush1.xpose.msra.mxu0 %v273
    %310 = vmatprep.subr.mxu0 0.0
    %311 = vmatpush2.xpose.msra.mxu0 0.0
    %312 = vmatprep.subr.mxu0 0.0
    %313 = vmatpush2.xpose.msra.mxu0 0.0
    %314 = vmatprep.subr.mxu0 0.0
    %315 = vmatpush2.xpose.msra.mxu0 0.0
    %316 = vmatprep.subr.mxu0 0.0
    %317 = vmatpush2.xpose.msra.mxu0 0.0
    %318 = vmatprep.subr.mxu0 0.0
    %319 = vmatpush2.xpose.msra.mxu0 0.0
    %320 = vmatprep.subr.mxu0 0.0
    %321 = vmatpush2.xpose.msra.mxu0 0.0
    %322 = vmatprep.subr.mxu0 0.0
    %323 = vmatpush2.xpose.msra.mxu0 0.0
    %324 = vmatprep.subr.mxu0 0.0
    %325 = vmatpush2.xpose.msra.mxu0 0.0
    %326 = vmatprep.subr.mxu0 0.0
    %327 = vmatpush2.xpose.msra.mxu0 0.0
    %328 = vmatprep.subr.mxu0 0.0
    %329 = vmatpush2.xpose.msra.mxu0 0.0
    %330 = vmatprep.subr.mxu0 0.0
    %331 = vmatpush2.xpose.msra.mxu0 0.0
    %332 = vmatprep.subr.mxu0 0.0
    %333 = vmatpush2.xpose.msra.mxu0 0.0
    %334 = vmatprep.subr.mxu0 0.0
    %335 = vmatpush2.xpose.msra.mxu0 0.0
    %336 = vmatprep.subr.mxu0 0.0
    %337 = vmatpush2.xpose.msra.mxu0 0.0
    %338 = vmatprep.subr.mxu0 0.0
    %339 = vmatpush2.xpose.msra.mxu0 0.0
    %340 = vmatprep.subr.mxu0 0.0
    %341 = vmatpush2.xpose.msra.mxu0 0.0
    %342 = vmatprep.mubr.f32.mxu0 0.0
    %343 = vmatmul.mubr.f32.gmra.mxu0 %v270
    %v344 = vpop.f32.mrf.mxu0
    %v345 = vadd.f32 0.0, %v344
    %v346 = vpop.f32.mrf.mxu0
    %347 = vdwg.mxu0
    %v348 = vadd.f32 %v265, %v345
    %349 = vrot.lane.b32.xlu0 %v107, 80
    %v350 = vpop.permute.xlu0 %349
    %v351 = vsel %vm111, %v350, 0
    %v354 = vsel %vm111, %v30, 0
    %v357 = vsel %vm111, %v31, 0
    %359 = vmatprep.subr.mxu0 0.0
    %360 = vmatpush1.xpose.msra.mxu0 0.0
    %361 = vmatprep.subr.mxu0 0.0
    %362 = vmatpush1.xpose.msra.mxu0 0.0
    %363 = vmatprep.subr.mxu0 0.0
    %364 = vmatpush1.xpose.msra.mxu0 0.0
    %365 = vmatprep.subr.mxu0 0.0
    %366 = vmatpush1.xpose.msra.mxu0 0.0
    %367 = vmatprep.subr.mxu0 0.0
    %368 = vmatpush1.xpose.msra.mxu0 0.0
    %369 = vmatprep.subr.mxu0 0.0
    %370 = vmatpush1.xpose.msra.mxu0 0.0
    %371 = vmatprep.subr.mxu0 0.0
    %372 = vmatpush1.xpose.msra.mxu0 0.0
    %373 = vmatprep.subr.mxu0 0.0
    %374 = vmatpush1.xpose.msra.mxu0 0.0
    %375 = vmatprep.subr.mxu0 0.0
    %376 = vmatpush1.xpose.msra.mxu0 0.0
    %377 = vmatprep.subr.mxu0 0.0
    %378 = vmatpush1.xpose.msra.mxu0 0.0
    %379 = vmatprep.subr.mxu0 0.0
    %380 = vmatpush1.xpose.msra.mxu0 0.0
    %381 = vmatprep.subr.mxu0 0.0
    %382 = vmatpush1.xpose.msra.mxu0 0.0
    %383 = vmatprep.subr.mxu0 0.0
    %384 = vmatpush1.xpose.msra.mxu0 0.0
    %385 = vmatprep.subr.mxu0 0.0
    %386 = vmatpush1.xpose.msra.mxu0 0.0
    %387 = vmatprep.subr.mxu0 0.0
    %388 = vmatpush1.xpose.msra.mxu0 %v357
    %389 = vmatprep.subr.mxu0 0.0
    %390 = vmatpush1.xpose.msra.mxu0 %v354
    %391 = vmatprep.subr.mxu0 0.0
    %392 = vmatpush2.xpose.msra.mxu0 0.0
    %393 = vmatprep.subr.mxu0 0.0
    %394 = vmatpush2.xpose.msra.mxu0 0.0
    %395 = vmatprep.subr.mxu0 0.0
    %396 = vmatpush2.xpose.msra.mxu0 0.0
    %397 = vmatprep.subr.mxu0 0.0
    %398 = vmatpush2.xpose.msra.mxu0 0.0
    %399 = vmatprep.subr.mxu0 0.0
    %400 = vmatpush2.xpose.msra.mxu0 0.0
    %401 = vmatprep.subr.mxu0 0.0
    %402 = vmatpush2.xpose.msra.mxu0 0.0
    %403 = vmatprep.subr.mxu0 0.0
    %404 = vmatpush2.xpose.msra.mxu0 0.0
    %405 = vmatprep.subr.mxu0 0.0
    %406 = vmatpush2.xpose.msra.mxu0 0.0
    %407 = vmatprep.subr.mxu0 0.0
    %408 = vmatpush2.xpose.msra.mxu0 0.0
    %409 = vmatprep.subr.mxu0 0.0
    %410 = vmatpush2.xpose.msra.mxu0 0.0
    %411 = vmatprep.subr.mxu0 0.0
    %412 = vmatpush2.xpose.msra.mxu0 0.0
    %413 = vmatprep.subr.mxu0 0.0
    %414 = vmatpush2.xpose.msra.mxu0 0.0
    %415 = vmatprep.subr.mxu0 0.0
    %416 = vmatpush2.xpose.msra.mxu0 0.0
    %417 = vmatprep.subr.mxu0 0.0
    %418 = vmatpush2.xpose.msra.mxu0 0.0
    %419 = vmatprep.subr.mxu0 0.0
    %420 = vmatpush2.xpose.msra.mxu0 0.0
    %421 = vmatprep.subr.mxu0 0.0
    %422 = vmatpush2.xpose.msra.mxu0 0.0
    %423 = vmatprep.mubr.f32.mxu0 0.0
    %424 = vmatmul.mubr.f32.gmra.mxu0 %v351
    %v425 = vpop.f32.mrf.mxu0
    %v426 = vadd.f32 0.0, %v425
    %v427 = vpop.f32.mrf.mxu0
    %428 = vdwg.mxu0
    %v429 = vadd.f32 %v348, %v426
    %v430 = vld [vmem:[%s3] sm:$0xff]
    %432 = vset.pattern.permute.xlu0 0
    %433 = vperm.xlu0 %432, %v430
    %v434 = vpop.permute.xlu0 %433
    %v436 = vadd.f32 %v429, %v434
    %v437 = vld [vmem:[%s4] sm:$0xff]
    %v438 = vld [vmem:[%s4 + $0x8] sm:$0xff]
    %v439 = vld [vmem:[%s4 + $0x10] sm:$0xff]
    %v440 = vld [vmem:[%s4 + $0x18] sm:$0xff]
    %v441 = vld [vmem:[%s5] sm:$0xff]
    %v442 = vld [vmem:[%s5 + $0x8] sm:$0xff]
    %v443 = vld [vmem:[%s5 + $0x10] sm:$0xff]
    %v444 = vld [vmem:[%s5 + $0x18] sm:$0xff]
    %v446 = vsel %vm111, %v104, 0
    %448 = vmatprep.subr.mxu0 0.0
    %449 = vmatpush1.msra.mxu0 0.0
    %450 = vmatprep.subr.mxu0 0.0
    %451 = vmatpush1.msra.mxu0 0.0
    %452 = vmatprep.subr.mxu0 0.0
    %453 = vmatpush1.msra.mxu0 0.0
    %454 = vmatprep.subr.mxu0 0.0
    %455 = vmatpush1.msra.mxu0 0.0
    %456 = vmatprep.subr.mxu0 0.0
    %457 = vmatpush1.msra.mxu0 0.0
    %458 = vmatprep.subr.mxu0 0.0
    %459 = vmatpush1.msra.mxu0 0.0
    %460 = vmatprep.subr.mxu0 0.0
    %461 = vmatpush1.msra.mxu0 0.0
    %462 = vmatprep.subr.mxu0 0.0
    %463 = vmatpush1.msra.mxu0 0.0
    %464 = vmatprep.subr.mxu0 0.0
    %465 = vmatpush1.msra.mxu0 0.0
    %466 = vmatprep.subr.mxu0 0.0
    %467 = vmatpush1.msra.mxu0 0.0
    %468 = vmatprep.subr.mxu0 0.0
    %469 = vmatpush1.msra.mxu0 0.0
    %470 = vmatprep.subr.mxu0 0.0
    %471 = vmatpush1.msra.mxu0 0.0
    %472 = vmatprep.subr.mxu0 0.0
    %473 = vmatpush1.msra.mxu0 0.0
    %474 = vmatprep.subr.mxu0 0.0
    %475 = vmatpush1.msra.mxu0 0.0
    %476 = vmatprep.subr.mxu0 %v444
    %477 = vmatpush1.msra.mxu0 %v443
    %478 = vmatprep.subr.mxu0 %v442
    %479 = vmatpush1.msra.mxu0 %v441
    %480 = vmatprep.subr.mxu0 0.0
    %481 = vmatpush2.msra.mxu0 0.0
    %482 = vmatprep.subr.mxu0 0.0
    %483 = vmatpush2.msra.mxu0 0.0
    %484 = vmatprep.subr.mxu0 0.0
    %485 = vmatpush2.msra.mxu0 0.0
    %486 = vmatprep.subr.mxu0 0.0
    %487 = vmatpush2.msra.mxu0 0.0
    %488 = vmatprep.subr.mxu0 0.0
    %489 = vmatpush2.msra.mxu0 0.0
    %490 = vmatprep.subr.mxu0 0.0
    %491 = vmatpush2.msra.mxu0 0.0
    %492 = vmatprep.subr.mxu0 0.0
    %493 = vmatpush2.msra.mxu0 0.0
    %494 = vmatprep.subr.mxu0 0.0
    %495 = vmatpush2.msra.mxu0 0.0
    %496 = vmatprep.subr.mxu0 0.0
    %497 = vmatpush2.msra.mxu0 0.0
    %498 = vmatprep.subr.mxu0 0.0
    %499 = vmatpush2.msra.mxu0 0.0
    %500 = vmatprep.subr.mxu0 0.0
    %501 = vmatpush2.msra.mxu0 0.0
    %502 = vmatprep.subr.mxu0 0.0
    %503 = vmatpush2.msra.mxu0 0.0
    %504 = vmatprep.subr.mxu0 0.0
    %505 = vmatpush2.msra.mxu0 0.0
    %506 = vmatprep.subr.mxu0 0.0
    %507 = vmatpush2.msra.mxu0 0.0
    %508 = vmatprep.subr.mxu0 0.0
    %509 = vmatpush2.msra.mxu0 0.0
    %510 = vmatprep.subr.mxu0 0.0
    %511 = vmatpush2.msra.mxu0 0.0
    %512 = vmatprep.mubr.f32.mxu0 0.0
    %513 = vmatmul.mubr.f32.gmra.mxu0 %v446
    %v514 = vpop.f32.mrf.mxu0
    %v515 = vadd.f32 0.0, %v514
    %v516 = vpop.f32.mrf.mxu0
    %v517 = vadd.f32 0.0, %v516
    %518 = vdwg.mxu0
    %v520 = vsel %vm111, %v436, 0
    %522 = vmatprep.subr.mxu0 0.0
    %523 = vmatpush1.msra.mxu0 0.0
    %524 = vmatprep.subr.mxu0 0.0
    %525 = vmatpush1.msra.mxu0 0.0
    %526 = vmatprep.subr.mxu0 0.0
    %527 = vmatpush1.msra.mxu0 0.0
    %528 = vmatprep.subr.mxu0 0.0
    %529 = vmatpush1.msra.mxu0 0.0
    %530 = vmatprep.subr.mxu0 0.0
    %531 = vmatpush1.msra.mxu0 0.0
    %532 = vmatprep.subr.mxu0 0.0
    %533 = vmatpush1.msra.mxu0 0.0
    %534 = vmatprep.subr.mxu0 0.0
    %535 = vmatpush1.msra.mxu0 0.0
    %536 = vmatprep.subr.mxu0 0.0
    %537 = vmatpush1.msra.mxu0 0.0
    %538 = vmatprep.subr.mxu0 0.0
    %539 = vmatpush1.msra.mxu0 0.0
    %540 = vmatprep.subr.mxu0 0.0
    %541 = vmatpush1.msra.mxu0 0.0
    %542 = vmatprep.subr.mxu0 0.0
    %543 = vmatpush1.msra.mxu0 0.0
    %544 = vmatprep.subr.mxu0 0.0
    %545 = vmatpush1.msra.mxu0 0.0
    %546 = vmatprep.subr.mxu0 0.0
    %547 = vmatpush1.msra.mxu0 0.0
    %548 = vmatprep.subr.mxu0 0.0
    %549 = vmatpush1.msra.mxu0 0.0
    %550 = vmatprep.subr.mxu0 %v440
    %551 = vmatpush1.msra.mxu0 %v439
    %552 = vmatprep.subr.mxu0 %v438
    %553 = vmatpush1.msra.mxu0 %v437
    %554 = vmatprep.subr.mxu0 0.0
    %555 = vmatpush2.msra.mxu0 0.0
    %556 = vmatprep.subr.mxu0 0.0
    %557 = vmatpush2.msra.mxu0 0.0
    %558 = vmatprep.subr.mxu0 0.0
    %559 = vmatpush2.msra.mxu0 0.0
    %560 = vmatprep.subr.mxu0 0.0
    %561 = vmatpush2.msra.mxu0 0.0
    %562 = vmatprep.subr.mxu0 0.0
    %563 = vmatpush2.msra.mxu0 0.0
    %564 = vmatprep.subr.mxu0 0.0
    %565 = vmatpush2.msra.mxu0 0.0
    %566 = vmatprep.subr.mxu0 0.0
    %567 = vmatpush2.msra.mxu0 0.0
    %568 = vmatprep.subr.mxu0 0.0
    %569 = vmatpush2.msra.mxu0 0.0
    %570 = vmatprep.subr.mxu0 0.0
    %571 = vmatpush2.msra.mxu0 0.0
    %572 = vmatprep.subr.mxu0 0.0
    %573 = vmatpush2.msra.mxu0 0.0
    %574 = vmatprep.subr.mxu0 0.0
    %575 = vmatpush2.msra.mxu0 0.0
    %576 = vmatprep.subr.mxu0 0.0
    %577 = vmatpush2.msra.mxu0 0.0
    %578 = vmatprep.subr.mxu0 0.0
    %579 = vmatpush2.msra.mxu0 0.0
    %580 = vmatprep.subr.mxu0 0.0
    %581 = vmatpush2.msra.mxu0 0.0
    %582 = vmatprep.subr.mxu0 0.0
    %583 = vmatpush2.msra.mxu0 0.0
    %584 = vmatprep.subr.mxu0 0.0
    %585 = vmatpush2.msra.mxu0 0.0
    %586 = vmatprep.mubr.f32.mxu0 0.0
    %587 = vmatmul.mubr.f32.gmra.mxu0 %v520
    %v588 = vpop.f32.mrf.mxu0
    %v589 = vadd.f32 %v515, %v588
    %v590 = vpop.f32.mrf.mxu0
    %v591 = vadd.f32 %v517, %v590
    %592 = vdwg.mxu0
    %593 = vst [vmem:[#allocation2] sm:$0xff] %v589
    %594 = vst [vmem:[#allocation2 + $0x8] sm:$0xff] %v591
    %s595 = scalar_lea.vmem %s0, 64
    %v596 = vld [vmem:[%s595] sm:$0xff]
    %v597 = vld [vmem:[%s595 + $0x8] sm:$0xff]
    %v598 = vld [vmem:[%s595 + $0x10] sm:$0xff]
    %v599 = vld [vmem:[%s595 + $0x18] sm:$0xff]
    %v600 = vld [vmem:[%s595 + $0x20] sm:$0xff]
    %v601 = vld [vmem:[%s595 + $0x28] sm:$0xff]
    %v602 = vld [vmem:[%s595 + $0x30] sm:$0xff]
    %v603 = vld [vmem:[%s595 + $0x38] sm:$0xff]
    %v604 = vld [vmem:[%s2] sm:$0xff]
    %v606 = vsel %vm33, %v604, 0
    %608 = vmatprep.subr.mxu0 0.0
    %609 = vmatpush1.msra.mxu0 0.0
    %610 = vmatprep.subr.mxu0 0.0
    %611 = vmatpush1.msra.mxu0 0.0
    %612 = vmatprep.subr.mxu0 0.0
    %613 = vmatpush1.msra.mxu0 0.0
    %614 = vmatprep.subr.mxu0 0.0
    %615 = vmatpush1.msra.mxu0 0.0
    %616 = vmatprep.subr.mxu0 0.0
    %617 = vmatpush1.msra.mxu0 0.0
    %618 = vmatprep.subr.mxu0 0.0
    %619 = vmatpush1.msra.mxu0 0.0
    %620 = vmatprep.subr.mxu0 0.0
    %621 = vmatpush1.msra.mxu0 0.0
    %622 = vmatprep.subr.mxu0 0.0
    %623 = vmatpush1.msra.mxu0 0.0
    %624 = vmatprep.subr.mxu0 0.0
    %625 = vmatpush1.msra.mxu0 %v603
    %626 = vmatprep.subr.mxu0 0.0
    %627 = vmatpush1.msra.mxu0 %v602
    %628 = vmatprep.subr.mxu0 0.0
    %629 = vmatpush1.msra.mxu0 %v601
    %630 = vmatprep.subr.mxu0 0.0
    %631 = vmatpush1.msra.mxu0 %v600
    %632 = vmatprep.subr.mxu0 0.0
    %633 = vmatpush1.msra.mxu0 %v599
    %634 = vmatprep.subr.mxu0 0.0
    %635 = vmatpush1.msra.mxu0 %v598
    %636 = vmatprep.subr.mxu0 0.0
    %637 = vmatpush1.msra.mxu0 %v597
    %638 = vmatprep.subr.mxu0 0.0
    %639 = vmatpush1.msra.mxu0 %v596
    %640 = vmatprep.subr.mxu0 0.0
    %641 = vmatpush2.msra.mxu0 0.0
    %642 = vmatprep.subr.mxu0 0.0
    %643 = vmatpush2.msra.mxu0 0.0
    %644 = vmatprep.subr.mxu0 0.0
    %645 = vmatpush2.msra.mxu0 0.0
    %646 = vmatprep.subr.mxu0 0.0
    %647 = vmatpush2.msra.mxu0 0.0
    %648 = vmatprep.subr.mxu0 0.0
    %649 = vmatpush2.msra.mxu0 0.0
    %650 = vmatprep.subr.mxu0 0.0
    %651 = vmatpush2.msra.mxu0 0.0
    %652 = vmatprep.subr.mxu0 0.0
    %653 = vmatpush2.msra.mxu0 0.0
    %654 = vmatprep.subr.mxu0 0.0
    %655 = vmatpush2.msra.mxu0 0.0
    %656 = vmatprep.subr.mxu0 0.0
    %657 = vmatpush2.msra.mxu0 0.0
    %658 = vmatprep.subr.mxu0 0.0
    %659 = vmatpush2.msra.mxu0 0.0
    %660 = vmatprep.subr.mxu0 0.0
    %661 = vmatpush2.msra.mxu0 0.0
    %662 = vmatprep.subr.mxu0 0.0
    %663 = vmatpush2.msra.mxu0 0.0
    %664 = vmatprep.subr.mxu0 0.0
    %665 = vmatpush2.msra.mxu0 0.0
    %666 = vmatprep.subr.mxu0 0.0
    %667 = vmatpush2.msra.mxu0 0.0
    %668 = vmatprep.subr.mxu0 0.0
    %669 = vmatpush2.msra.mxu0 0.0
    %670 = vmatprep.subr.mxu0 0.0
    %671 = vmatpush2.msra.mxu0 0.0
    %672 = vmatprep.mubr.f32.mxu0 0.0
    %673 = vmatmul.mubr.f32.gmra.mxu0 %v606
    %v674 = vpop.f32.mrf.mxu0
    %v675 = vadd.f32 0.0, %v674
    %v676 = vpop.f32.mrf.mxu0
    %677 = vdwg.mxu0
    %v678 = vld [vmem:[%s1] sm:$0xff]
    %680 = vrot.lane.b32.xlu0 %v678, 112
    %v681 = vpop.permute.xlu0 %680
    %v682 = vsel %vm111, %v681, 0
    %v685 = vsel %vm111, %v598, 0
    %v688 = vsel %vm111, %v599, 0
    %690 = vmatprep.subr.mxu0 0.0
    %691 = vmatpush1.xpose.msra.mxu0 0.0
    %692 = vmatprep.subr.mxu0 0.0
    %693 = vmatpush1.xpose.msra.mxu0 0.0
    %694 = vmatprep.subr.mxu0 0.0
    %695 = vmatpush1.xpose.msra.mxu0 0.0
    %696 = vmatprep.subr.mxu0 0.0
    %697 = vmatpush1.xpose.msra.mxu0 0.0
    %698 = vmatprep.subr.mxu0 0.0
    %699 = vmatpush1.xpose.msra.mxu0 0.0
    %700 = vmatprep.subr.mxu0 0.0
    %701 = vmatpush1.xpose.msra.mxu0 0.0
    %702 = vmatprep.subr.mxu0 0.0
    %703 = vmatpush1.xpose.msra.mxu0 0.0
    %704 = vmatprep.subr.mxu0 0.0
    %705 = vmatpush1.xpose.msra.mxu0 0.0
    %706 = vmatprep.subr.mxu0 0.0
    %707 = vmatpush1.xpose.msra.mxu0 0.0
    %708 = vmatprep.subr.mxu0 0.0
    %709 = vmatpush1.xpose.msra.mxu0 0.0
    %710 = vmatprep.subr.mxu0 0.0
    %711 = vmatpush1.xpose.msra.mxu0 0.0
    %712 = vmatprep.subr.mxu0 0.0
    %713 = vmatpush1.xpose.msra.mxu0 0.0
    %714 = vmatprep.subr.mxu0 0.0
    %715 = vmatpush1.xpose.msra.mxu0 0.0
    %716 = vmatprep.subr.mxu0 0.0
    %717 = vmatpush1.xpose.msra.mxu0 0.0
    %718 = vmatprep.subr.mxu0 0.0
    %719 = vmatpush1.xpose.msra.mxu0 %v688
    %720 = vmatprep.subr.mxu0 0.0
    %721 = vmatpush1.xpose.msra.mxu0 %v685
    %722 = vmatprep.subr.mxu0 0.0
    %723 = vmatpush2.xpose.msra.mxu0 0.0
    %724 = vmatprep.subr.mxu0 0.0
    %725 = vmatpush2.xpose.msra.mxu0 0.0
    %726 = vmatprep.subr.mxu0 0.0
    %727 = vmatpush2.xpose.msra.mxu0 0.0
    %728 = vmatprep.subr.mxu0 0.0
    %729 = vmatpush2.xpose.msra.mxu0 0.0
    %730 = vmatprep.subr.mxu0 0.0
    %731 = vmatpush2.xpose.msra.mxu0 0.0
    %732 = vmatprep.subr.mxu0 0.0
    %733 = vmatpush2.xpose.msra.mxu0 0.0
    %734 = vmatprep.subr.mxu0 0.0
    %735 = vmatpush2.xpose.msra.mxu0 0.0
    %736 = vmatprep.subr.mxu0 0.0
    %737 = vmatpush2.xpose.msra.mxu0 0.0
    %738 = vmatprep.subr.mxu0 0.0
    %739 = vmatpush2.xpose.msra.mxu0 0.0
    %740 = vmatprep.subr.mxu0 0.0
    %741 = vmatpush2.xpose.msra.mxu0 0.0
    %742 = vmatprep.subr.mxu0 0.0
    %743 = vmatpush2.xpose.msra.mxu0 0.0
    %744 = vmatprep.subr.mxu0 0.0
    %745 = vmatpush2.xpose.msra.mxu0 0.0
    %746 = vmatprep.subr.mxu0 0.0
    %747 = vmatpush2.xpose.msra.mxu0 0.0
    %748 = vmatprep.subr.mxu0 0.0
    %749 = vmatpush2.xpose.msra.mxu0 0.0
    %750 = vmatprep.subr.mxu0 0.0
    %751 = vmatpush2.xpose.msra.mxu0 0.0
    %752 = vmatprep.subr.mxu0 0.0
    %753 = vmatpush2.xpose.msra.mxu0 0.0
    %754 = vmatprep.mubr.f32.mxu0 0.0
    %755 = vmatmul.mubr.f32.gmra.mxu0 %v682
    %v756 = vpop.f32.mrf.mxu0
    %v757 = vadd.f32 0.0, %v756
    %v758 = vpop.f32.mrf.mxu0
    %759 = vdwg.mxu0
    %v760 = vsel %vm111, %v678, 0
    %v763 = vsel %vm111, %v596, 0
    %v766 = vsel %vm111, %v597, 0
    %768 = vmatprep.subr.mxu0 0.0
    %769 = vmatpush1.xpose.msra.mxu0 0.0
    %770 = vmatprep.subr.mxu0 0.0
    %771 = vmatpush1.xpose.msra.mxu0 0.0
    %772 = vmatprep.subr.mxu0 0.0
    %773 = vmatpush1.xpose.msra.mxu0 0.0
    %774 = vmatprep.subr.mxu0 0.0
    %775 = vmatpush1.xpose.msra.mxu0 0.0
    %776 = vmatprep.subr.mxu0 0.0
    %777 = vmatpush1.xpose.msra.mxu0 0.0
    %778 = vmatprep.subr.mxu0 0.0
    %779 = vmatpush1.xpose.msra.mxu0 0.0
    %780 = vmatprep.subr.mxu0 0.0
    %781 = vmatpush1.xpose.msra.mxu0 0.0
    %782 = vmatprep.subr.mxu0 0.0
    %783 = vmatpush1.xpose.msra.mxu0 0.0
    %784 = vmatprep.subr.mxu0 0.0
    %785 = vmatpush1.xpose.msra.mxu0 0.0
    %786 = vmatprep.subr.mxu0 0.0
    %787 = vmatpush1.xpose.msra.mxu0 0.0
    %788 = vmatprep.subr.mxu0 0.0
    %789 = vmatpush1.xpose.msra.mxu0 0.0
    %790 = vmatprep.subr.mxu0 0.0
    %791 = vmatpush1.xpose.msra.mxu0 0.0
    %792 = vmatprep.subr.mxu0 0.0
    %793 = vmatpush1.xpose.msra.mxu0 0.0
    %794 = vmatprep.subr.mxu0 0.0
    %795 = vmatpush1.xpose.msra.mxu0 0.0
    %796 = vmatprep.subr.mxu0 0.0
    %797 = vmatpush1.xpose.msra.mxu0 %v766
    %798 = vmatprep.subr.mxu0 0.0
    %799 = vmatpush1.xpose.msra.mxu0 %v763
    %800 = vmatprep.subr.mxu0 0.0
    %801 = vmatpush2.xpose.msra.mxu0 0.0
    %802 = vmatprep.subr.mxu0 0.0
    %803 = vmatpush2.xpose.msra.mxu0 0.0
    %804 = vmatprep.subr.mxu0 0.0
    %805 = vmatpush2.xpose.msra.mxu0 0.0
    %806 = vmatprep.subr.mxu0 0.0
    %807 = vmatpush2.xpose.msra.mxu0 0.0
    %808 = vmatprep.subr.mxu0 0.0
    %809 = vmatpush2.xpose.msra.mxu0 0.0
    %810 = vmatprep.subr.mxu0 0.0
    %811 = vmatpush2.xpose.msra.mxu0 0.0
    %812 = vmatprep.subr.mxu0 0.0
    %813 = vmatpush2.xpose.msra.mxu0 0.0
    %814 = vmatprep.subr.mxu0 0.0
    %815 = vmatpush2.xpose.msra.mxu0 0.0
    %816 = vmatprep.subr.mxu0 0.0
    %817 = vmatpush2.xpose.msra.mxu0 0.0
    %818 = vmatprep.subr.mxu0 0.0
    %819 = vmatpush2.xpose.msra.mxu0 0.0
    %820 = vmatprep.subr.mxu0 0.0
    %821 = vmatpush2.xpose.msra.mxu0 0.0
    %822 = vmatprep.subr.mxu0 0.0
    %823 = vmatpush2.xpose.msra.mxu0 0.0
    %824 = vmatprep.subr.mxu0 0.0
    %825 = vmatpush2.xpose.msra.mxu0 0.0
    %826 = vmatprep.subr.mxu0 0.0
    %827 = vmatpush2.xpose.msra.mxu0 0.0
    %828 = vmatprep.subr.mxu0 0.0
    %829 = vmatpush2.xpose.msra.mxu0 0.0
    %830 = vmatprep.subr.mxu0 0.0
    %831 = vmatpush2.xpose.msra.mxu0 0.0
    %832 = vmatprep.mubr.f32.mxu0 0.0
    %833 = vmatmul.mubr.f32.gmra.mxu0 %v760
    %v834 = vpop.f32.mrf.mxu0
    %v835 = vadd.f32 %v757, %v834
    %v836 = vpop.f32.mrf.mxu0
    %837 = vdwg.mxu0
    %838 = vrot.lane.b32.xlu0 %v678, 96
    %v839 = vpop.permute.xlu0 %838
    %v840 = vsel %vm111, %v839, 0
    %v843 = vsel %vm111, %v600, 0
    %v846 = vsel %vm111, %v601, 0
    %848 = vmatprep.subr.mxu0 0.0
    %849 = vmatpush1.xpose.msra.mxu0 0.0
    %850 = vmatprep.subr.mxu0 0.0
    %851 = vmatpush1.xpose.msra.mxu0 0.0
    %852 = vmatprep.subr.mxu0 0.0
    %853 = vmatpush1.xpose.msra.mxu0 0.0
    %854 = vmatprep.subr.mxu0 0.0
    %855 = vmatpush1.xpose.msra.mxu0 0.0
    %856 = vmatprep.subr.mxu0 0.0
    %857 = vmatpush1.xpose.msra.mxu0 0.0
    %858 = vmatprep.subr.mxu0 0.0
    %859 = vmatpush1.xpose.msra.mxu0 0.0
    %860 = vmatprep.subr.mxu0 0.0
    %861 = vmatpush1.xpose.msra.mxu0 0.0
    %862 = vmatprep.subr.mxu0 0.0
    %863 = vmatpush1.xpose.msra.mxu0 0.0
    %864 = vmatprep.subr.mxu0 0.0
    %865 = vmatpush1.xpose.msra.mxu0 0.0
    %866 = vmatprep.subr.mxu0 0.0
    %867 = vmatpush1.xpose.msra.mxu0 0.0
    %868 = vmatprep.subr.mxu0 0.0
    %869 = vmatpush1.xpose.msra.mxu0 0.0
    %870 = vmatprep.subr.mxu0 0.0
    %871 = vmatpush1.xpose.msra.mxu0 0.0
    %872 = vmatprep.subr.mxu0 0.0
    %873 = vmatpush1.xpose.msra.mxu0 0.0
    %874 = vmatprep.subr.mxu0 0.0
    %875 = vmatpush1.xpose.msra.mxu0 0.0
    %876 = vmatprep.subr.mxu0 0.0
    %877 = vmatpush1.xpose.msra.mxu0 %v846
    %878 = vmatprep.subr.mxu0 0.0
    %879 = vmatpush1.xpose.msra.mxu0 %v843
    %880 = vmatprep.subr.mxu0 0.0
    %881 = vmatpush2.xpose.msra.mxu0 0.0
    %882 = vmatprep.subr.mxu0 0.0
    %883 = vmatpush2.xpose.msra.mxu0 0.0
    %884 = vmatprep.subr.mxu0 0.0
    %885 = vmatpush2.xpose.msra.mxu0 0.0
    %886 = vmatprep.subr.mxu0 0.0
    %887 = vmatpush2.xpose.msra.mxu0 0.0
    %888 = vmatprep.subr.mxu0 0.0
    %889 = vmatpush2.xpose.msra.mxu0 0.0
    %890 = vmatprep.subr.mxu0 0.0
    %891 = vmatpush2.xpose.msra.mxu0 0.0
    %892 = vmatprep.subr.mxu0 0.0
    %893 = vmatpush2.xpose.msra.mxu0 0.0
    %894 = vmatprep.subr.mxu0 0.0
    %895 = vmatpush2.xpose.msra.mxu0 0.0
    %896 = vmatprep.subr.mxu0 0.0
    %897 = vmatpush2.xpose.msra.mxu0 0.0
    %898 = vmatprep.subr.mxu0 0.0
    %899 = vmatpush2.xpose.msra.mxu0 0.0
    %900 = vmatprep.subr.mxu0 0.0
    %901 = vmatpush2.xpose.msra.mxu0 0.0
    %902 = vmatprep.subr.mxu0 0.0
    %903 = vmatpush2.xpose.msra.mxu0 0.0
    %904 = vmatprep.subr.mxu0 0.0
    %905 = vmatpush2.xpose.msra.mxu0 0.0
    %906 = vmatprep.subr.mxu0 0.0
    %907 = vmatpush2.xpose.msra.mxu0 0.0
    %908 = vmatprep.subr.mxu0 0.0
    %909 = vmatpush2.xpose.msra.mxu0 0.0
    %910 = vmatprep.subr.mxu0 0.0
    %911 = vmatpush2.xpose.msra.mxu0 0.0
    %912 = vmatprep.mubr.f32.mxu0 0.0
    %913 = vmatmul.mubr.f32.gmra.mxu0 %v840
    %v914 = vpop.f32.mrf.mxu0
    %v915 = vadd.f32 0.0, %v914
    %v916 = vpop.f32.mrf.mxu0
    %917 = vdwg.mxu0
    %v918 = vadd.f32 %v835, %v915
    %919 = vrot.lane.b32.xlu0 %v678, 80
    %v920 = vpop.permute.xlu0 %919
    %v921 = vsel %vm111, %v920, 0
    %v924 = vsel %vm111, %v602, 0
    %v927 = vsel %vm111, %v603, 0
    %929 = vmatprep.subr.mxu0 0.0
    %930 = vmatpush1.xpose.msra.mxu0 0.0
    %931 = vmatprep.subr.mxu0 0.0
    %932 = vmatpush1.xpose.msra.mxu0 0.0
    %933 = vmatprep.subr.mxu0 0.0
    %934 = vmatpush1.xpose.msra.mxu0 0.0
    %935 = vmatprep.subr.mxu0 0.0
    %936 = vmatpush1.xpose.msra.mxu0 0.0
    %937 = vmatprep.subr.mxu0 0.0
    %938 = vmatpush1.xpose.msra.mxu0 0.0
    %939 = vmatprep.subr.mxu0 0.0
    %940 = vmatpush1.xpose.msra.mxu0 0.0
    %941 = vmatprep.subr.mxu0 0.0
    %942 = vmatpush1.xpose.msra.mxu0 0.0
    %943 = vmatprep.subr.mxu0 0.0
    %944 = vmatpush1.xpose.msra.mxu0 0.0
    %945 = vmatprep.subr.mxu0 0.0
    %946 = vmatpush1.xpose.msra.mxu0 0.0
    %947 = vmatprep.subr.mxu0 0.0
    %948 = vmatpush1.xpose.msra.mxu0 0.0
    %949 = vmatprep.subr.mxu0 0.0
    %950 = vmatpush1.xpose.msra.mxu0 0.0
    %951 = vmatprep.subr.mxu0 0.0
    %952 = vmatpush1.xpose.msra.mxu0 0.0
    %953 = vmatprep.subr.mxu0 0.0
    %954 = vmatpush1.xpose.msra.mxu0 0.0
    %955 = vmatprep.subr.mxu0 0.0
    %956 = vmatpush1.xpose.msra.mxu0 0.0
    %957 = vmatprep.subr.mxu0 0.0
    %958 = vmatpush1.xpose.msra.mxu0 %v927
    %959 = vmatprep.subr.mxu0 0.0
    %960 = vmatpush1.xpose.msra.mxu0 %v924
    %961 = vmatprep.subr.mxu0 0.0
    %962 = vmatpush2.xpose.msra.mxu0 0.0
    %963 = vmatprep.subr.mxu0 0.0
    %964 = vmatpush2.xpose.msra.mxu0 0.0
    %965 = vmatprep.subr.mxu0 0.0
    %966 = vmatpush2.xpose.msra.mxu0 0.0
    %967 = vmatprep.subr.mxu0 0.0
    %968 = vmatpush2.xpose.msra.mxu0 0.0
    %969 = vmatprep.subr.mxu0 0.0
    %970 = vmatpush2.xpose.msra.mxu0 0.0
    %971 = vmatprep.subr.mxu0 0.0
    %972 = vmatpush2.xpose.msra.mxu0 0.0
    %973 = vmatprep.subr.mxu0 0.0
    %974 = vmatpush2.xpose.msra.mxu0 0.0
    %975 = vmatprep.subr.mxu0 0.0
    %976 = vmatpush2.xpose.msra.mxu0 0.0
    %977 = vmatprep.subr.mxu0 0.0
    %978 = vmatpush2.xpose.msra.mxu0 0.0
    %979 = vmatprep.subr.mxu0 0.0
    %980 = vmatpush2.xpose.msra.mxu0 0.0
    %981 = vmatprep.subr.mxu0 0.0
    %982 = vmatpush2.xpose.msra.mxu0 0.0
    %983 = vmatprep.subr.mxu0 0.0
    %984 = vmatpush2.xpose.msra.mxu0 0.0
    %985 = vmatprep.subr.mxu0 0.0
    %986 = vmatpush2.xpose.msra.mxu0 0.0
    %987 = vmatprep.subr.mxu0 0.0
    %988 = vmatpush2.xpose.msra.mxu0 0.0
    %989 = vmatprep.subr.mxu0 0.0
    %990 = vmatpush2.xpose.msra.mxu0 0.0
    %991 = vmatprep.subr.mxu0 0.0
    %992 = vmatpush2.xpose.msra.mxu0 0.0
    %993 = vmatprep.mubr.f32.mxu0 0.0
    %994 = vmatmul.mubr.f32.gmra.mxu0 %v921
    %v995 = vpop.f32.mrf.mxu0
    %v996 = vadd.f32 0.0, %v995
    %v997 = vpop.f32.mrf.mxu0
    %998 = vdwg.mxu0
    %v999 = vadd.f32 %v918, %v996
    %v1000 = vld [vmem:[%s3] sm:$0xff]
    %1002 = vset.pattern.permute.xlu0 0
    %1003 = vperm.xlu0 %1002, %v1000
    %v1004 = vpop.permute.xlu0 %1003
    %v1006 = vadd.f32 %v999, %v1004
    %v1007 = vld [vmem:[%s4] sm:$0xff]
    %v1008 = vld [vmem:[%s4 + $0x8] sm:$0xff]
    %v1009 = vld [vmem:[%s4 + $0x10] sm:$0xff]
    %v1010 = vld [vmem:[%s4 + $0x18] sm:$0xff]
    %v1011 = vld [vmem:[%s5] sm:$0xff]
    %v1012 = vld [vmem:[%s5 + $0x8] sm:$0xff]
    %v1013 = vld [vmem:[%s5 + $0x10] sm:$0xff]
    %v1014 = vld [vmem:[%s5 + $0x18] sm:$0xff]
    %v1016 = vsel %vm111, %v675, 0
    %1018 = vmatprep.subr.mxu0 0.0
    %1019 = vmatpush1.msra.mxu0 0.0
    %1020 = vmatprep.subr.mxu0 0.0
    %1021 = vmatpush1.msra.mxu0 0.0
    %1022 = vmatprep.subr.mxu0 0.0
    %1023 = vmatpush1.msra.mxu0 0.0
    %1024 = vmatprep.subr.mxu0 0.0
    %1025 = vmatpush1.msra.mxu0 0.0
    %1026 = vmatprep.subr.mxu0 0.0
    %1027 = vmatpush1.msra.mxu0 0.0
    %1028 = vmatprep.subr.mxu0 0.0
    %1029 = vmatpush1.msra.mxu0 0.0
    %1030 = vmatprep.subr.mxu0 0.0
    %1031 = vmatpush1.msra.mxu0 0.0
    %1032 = vmatprep.subr.mxu0 0.0
    %1033 = vmatpush1.msra.mxu0 0.0
    %1034 = vmatprep.subr.mxu0 0.0
    %1035 = vmatpush1.msra.mxu0 0.0
    %1036 = vmatprep.subr.mxu0 0.0
    %1037 = vmatpush1.msra.mxu0 0.0
    %1038 = vmatprep.subr.mxu0 0.0
    %1039 = vmatpush1.msra.mxu0 0.0
    %1040 = vmatprep.subr.mxu0 0.0
    %1041 = vmatpush1.msra.mxu0 0.0
    %1042 = vmatprep.subr.mxu0 0.0
    %1043 = vmatpush1.msra.mxu0 0.0
    %1044 = vmatprep.subr.mxu0 0.0
    %1045 = vmatpush1.msra.mxu0 0.0
    %1046 = vmatprep.subr.mxu0 %v1014
    %1047 = vmatpush1.msra.mxu0 %v1013
    %1048 = vmatprep.subr.mxu0 %v1012
    %1049 = vmatpush1.msra.mxu0 %v1011
    %1050 = vmatprep.subr.mxu0 0.0
    %1051 = vmatpush2.msra.mxu0 0.0
    %1052 = vmatprep.subr.mxu0 0.0
    %1053 = vmatpush2.msra.mxu0 0.0
    %1054 = vmatprep.subr.mxu0 0.0
    %1055 = vmatpush2.msra.mxu0 0.0
    %1056 = vmatprep.subr.mxu0 0.0
    %1057 = vmatpush2.msra.mxu0 0.0
    %1058 = vmatprep.subr.mxu0 0.0
    %1059 = vmatpush2.msra.mxu0 0.0
    %1060 = vmatprep.subr.mxu0 0.0
    %1061 = vmatpush2.msra.mxu0 0.0
    %1062 = vmatprep.subr.mxu0 0.0
    %1063 = vmatpush2.msra.mxu0 0.0
    %1064 = vmatprep.subr.mxu0 0.0
    %1065 = vmatpush2.msra.mxu0 0.0
    %1066 = vmatprep.subr.mxu0 0.0
    %1067 = vmatpush2.msra.mxu0 0.0
    %1068 = vmatprep.subr.mxu0 0.0
    %1069 = vmatpush2.msra.mxu0 0.0
    %1070 = vmatprep.subr.mxu0 0.0
    %1071 = vmatpush2.msra.mxu0 0.0
    %1072 = vmatprep.subr.mxu0 0.0
    %1073 = vmatpush2.msra.mxu0 0.0
    %1074 = vmatprep.subr.mxu0 0.0
    %1075 = vmatpush2.msra.mxu0 0.0
    %1076 = vmatprep.subr.mxu0 0.0
    %1077 = vmatpush2.msra.mxu0 0.0
    %1078 = vmatprep.subr.mxu0 0.0
    %1079 = vmatpush2.msra.mxu0 0.0
    %1080 = vmatprep.subr.mxu0 0.0
    %1081 = vmatpush2.msra.mxu0 0.0
    %1082 = vmatprep.mubr.f32.mxu0 0.0
    %1083 = vmatmul.mubr.f32.gmra.mxu0 %v1016
    %v1084 = vpop.f32.mrf.mxu0
    %v1085 = vadd.f32 0.0, %v1084
    %v1086 = vpop.f32.mrf.mxu0
    %v1087 = vadd.f32 0.0, %v1086
    %1088 = vdwg.mxu0
    %v1090 = vsel %vm111, %v1006, 0
    %1092 = vmatprep.subr.mxu0 0.0
    %1093 = vmatpush1.msra.mxu0 0.0
    %1094 = vmatprep.subr.mxu0 0.0
    %1095 = vmatpush1.msra.mxu0 0.0
    %1096 = vmatprep.subr.mxu0 0.0
    %1097 = vmatpush1.msra.mxu0 0.0
    %1098 = vmatprep.subr.mxu0 0.0
    %1099 = vmatpush1.msra.mxu0 0.0
    %1100 = vmatprep.subr.mxu0 0.0
    %1101 = vmatpush1.msra.mxu0 0.0
    %1102 = vmatprep.subr.mxu0 0.0
    %1103 = vmatpush1.msra.mxu0 0.0
    %1104 = vmatprep.subr.mxu0 0.0
    %1105 = vmatpush1.msra.mxu0 0.0
    %1106 = vmatprep.subr.mxu0 0.0
    %1107 = vmatpush1.msra.mxu0 0.0
    %1108 = vmatprep.subr.mxu0 0.0
    %1109 = vmatpush1.msra.mxu0 0.0
    %1110 = vmatprep.subr.mxu0 0.0
    %1111 = vmatpush1.msra.mxu0 0.0
    %1112 = vmatprep.subr.mxu0 0.0
    %1113 = vmatpush1.msra.mxu0 0.0
    %1114 = vmatprep.subr.mxu0 0.0
    %1115 = vmatpush1.msra.mxu0 0.0
    %1116 = vmatprep.subr.mxu0 0.0
    %1117 = vmatpush1.msra.mxu0 0.0
    %1118 = vmatprep.subr.mxu0 0.0
    %1119 = vmatpush1.msra.mxu0 0.0
    %1120 = vmatprep.subr.mxu0 %v1010
    %1121 = vmatpush1.msra.mxu0 %v1009
    %1122 = vmatprep.subr.mxu0 %v1008
    %1123 = vmatpush1.msra.mxu0 %v1007
    %1124 = vmatprep.subr.mxu0 0.0
    %1125 = vmatpush2.msra.mxu0 0.0
    %1126 = vmatprep.subr.mxu0 0.0
    %1127 = vmatpush2.msra.mxu0 0.0
    %1128 = vmatprep.subr.mxu0 0.0
    %1129 = vmatpush2.msra.mxu0 0.0
    %1130 = vmatprep.subr.mxu0 0.0
    %1131 = vmatpush2.msra.mxu0 0.0
    %1132 = vmatprep.subr.mxu0 0.0
    %1133 = vmatpush2.msra.mxu0 0.0
    %1134 = vmatprep.subr.mxu0 0.0
    %1135 = vmatpush2.msra.mxu0 0.0
    %1136 = vmatprep.subr.mxu0 0.0
    %1137 = vmatpush2.msra.mxu0 0.0
    %1138 = vmatprep.subr.mxu0 0.0
    %1139 = vmatpush2.msra.mxu0 0.0
    %1140 = vmatprep.subr.mxu0 0.0
    %1141 = vmatpush2.msra.mxu0 0.0
    %1142 = vmatprep.subr.mxu0 0.0
    %1143 = vmatpush2.msra.mxu0 0.0
    %1144 = vmatprep.subr.mxu0 0.0
    %1145 = vmatpush2.msra.mxu0 0.0
    %1146 = vmatprep.subr.mxu0 0.0
    %1147 = vmatpush2.msra.mxu0 0.0
    %1148 = vmatprep.subr.mxu0 0.0
    %1149 = vmatpush2.msra.mxu0 0.0
    %1150 = vmatprep.subr.mxu0 0.0
    %1151 = vmatpush2.msra.mxu0 0.0
    %1152 = vmatprep.subr.mxu0 0.0
    %1153 = vmatpush2.msra.mxu0 0.0
    %1154 = vmatprep.subr.mxu0 0.0
    %1155 = vmatpush2.msra.mxu0 0.0
    %1156 = vmatprep.mubr.f32.mxu0 0.0
    %1157 = vmatmul.mubr.f32.gmra.mxu0 %v1090
    %v1158 = vpop.f32.mrf.mxu0
    %v1159 = vadd.f32 %v1085, %v1158
    %v1160 = vpop.f32.mrf.mxu0
    %v1161 = vadd.f32 %v1087, %v1160
    %1162 = vdwg.mxu0
    %s1163 = scalar_lea.vmem [#allocation2], 16
    %1164 = vst [vmem:[%s1163] sm:$0xff] %v1159
    %1165 = vst [vmem:[%s1163 + $0x8] sm:$0xff] %v1161
    // Predicated region
    $region26: #{tpu_custom_call.1} parent=1 // pred_check
      _
    $region27: #{tpu_custom_call.1} parent=1 // pred_check_branch
      %1167 = sbr.rel (0) target = $region29
    $region28: #{tpu_custom_call.1} parent=1 // pred_region
      %s1169 = ssub.s32 512, 512
      %1170 = vsyncadd [#allocation3], %s1169
      %s1171 = sshll.u32 [#allocation2], 4
      %s1172 = int_to_ptr.vmem [resolvable:$true] %s1171
      %1177 = dma.vmem_to_hbm [thread:$0]  %s1172, 512, %s6, [#allocation3], 256, 256, 16
    $region29: #{tpu_custom_call.1} parent=1 // pred_fallthru
      _
    // Predicated region
    $region30: #{tpu_custom_call.1} parent=1 // pred_check
      _
    $region31: #{tpu_custom_call.1} parent=1 // pred_check_branch
      %1179 = sbr.rel (0) target = $region33
    $region32: #{tpu_custom_call.1} parent=1 // pred_region
      %1180 = dma.done [#allocation3], 512
    $region33: #{tpu_custom_call.1} parent=1 // pred_fallthru
      _
    %1181 = vsyncpa [#allocation3], 1

</llo_original>
